<compile_context>
chip_gen: v6e
topology: v6e:2x2x1
jax: 0.10.0
libtpu: 0.0.40
codegen_flags: <defaults>
</compile_context>

<pallas_src>
import functools

import jax
import jax.numpy as jnp
from jax import lax
from jax.experimental import pallas as pl
from jax.experimental.pallas import tpu as pltpu


def _convblock_kernel(x_ref, w_ref, m_ref, g_ref, be_ref, o_ref,
                      sum_ref, ssq_ref, *,
                      H, W, KH, KW, cin_p, lblk, n_total, eps, use_im2col):
    """Grid = (Cout blocks ["parallel"], batch blocks ["arbitrary"]).

    x_ref  : (cin_p, lblk)          this batch-block's input, lane axis = B_BLK*H*W
    w_ref  : (tc_c, KH*KW*cin_p)    im2col-ordered conv weight (bf16)
    m_ref  : (KH*KW, lblk)          precomputed 'same'-padding masks (f32), resident
    g_ref  : (tc_c, 1)              BN gamma
    be_ref : (tc_c, 1)              BN beta
    o_ref  : (tc_c, N*H*W)          output block, resident in VMEM across batch axis
    sum_ref, ssq_ref : (tc_c, 1)    running per-channel sum / sum of squares (f32)
    """
    b = pl.program_id(1)
    nb = pl.num_programs(1)

    x = x_ref[...]                                    # (cin_p, lblk) f32
    m = m_ref[...]                                    # (KH*KW, lblk) f32
    w_all = w_ref[...]                                # (tc_c, KH*KW*cin_p) bf16
    ph, pw = (KH - 1) // 2, (KW - 1) // 2             # PyTorch 'same' split

    # im2col taps: XLU lane-roll + precomputed-mask multiply (zero 'same' padding).
    # Rolls that cross an image (or batch-element) boundary are zeroed by the mask.
    taps = []
    conv = None
    for dy in range(KH):
        for dx in range(KW):
            t = dy * KW + dx
            s = (dy - ph) * W + (dx - pw)             # flat lane shift
            shifted = x if s == 0 else pltpu.roll(x, (-s) % lblk, 1)
            tap = shifted * m[t:t + 1, :]             # f32 mask multiply
            if use_im2col:
                taps.append(tap)
            else:
                # streaming path: no im2col slab, accumulate per-tap matmuls
                part = lax.dot_general(
                    w_all[:, t * cin_p:(t + 1) * cin_p],
                    tap.astype(jnp.bfloat16),
                    dimension_numbers=(((1,), (0,)), ((), ())),
                    preferred_element_type=jnp.float32)
                conv = part if conv is None else conv + part

    if use_im2col:
        # f32 concat (cin_p is sublane-aligned), single cast, one fat bf16 matmul.
        patches = jnp.concatenate(taps, axis=0).astype(jnp.bfloat16)
        conv = lax.dot_general(
            w_all, patches,
            dimension_numbers=(((1,), (0,)), ((), ())),
            preferred_element_type=jnp.float32)       # (tc_c, lblk) f32

    # Write this batch-block's conv result into the resident output block.
    off = pl.multiple_of(b * lblk, 128)
    o_ref[:, pl.ds(off, lblk)] = conv

    # Running BN statistics (training-mode batch stats, biased variance).
    @pl.when(b == 0)
    def _():
        sum_ref[...] = jnp.zeros_like(sum_ref)
        ssq_ref[...] = jnp.zeros_like(ssq_ref)

    sum_ref[...] += jnp.sum(conv, axis=1, keepdims=True)
    ssq_ref[...] += jnp.sum(conv * conv, axis=1, keepdims=True)

    # Finalize: per-channel scale/shift FMA + ReLU over the resident output.
    @pl.when(b == nb - 1)
    def _():
        cnt = jnp.float32(n_total)
        mean = sum_ref[...] / cnt
        var = jnp.maximum(ssq_ref[...] / cnt - mean * mean, 0.0)
        scale = g_ref[...] * lax.rsqrt(var + eps)     # fold gamma into scale
        shift = be_ref[...] - mean * scale
        o_ref[...] = jnp.maximum(o_ref[...] * scale + shift, 0.0)


def conv_block(x_nchw, weight, bias, gamma, beta, *, eps=1e-5):
    """ConvBlock(in_c, out_c, k, stride=1, padding='same', activation='relu',
    norm='batch_norm') forward pass in training mode.

    x_nchw : (N, Cin, H, W) float32
    weight : (Cout, Cin, KH, KW)
    bias, gamma, beta : (Cout,)   (bias accepted for API parity but unused:
        it is algebraically cancelled by training-mode BatchNorm)
    returns (N, Cout, H, W) float32
    """
    del bias  # cancelled exactly by the BN mean subtraction
    N, Cin, H, W = x_nchw.shape
    Cout, _, KH, KW = weight.shape
    HW = H * W

    # ---- layout prep (wrapper-side, tiny / one-pass ops) -----------------
    # Pad Cin to a multiple of 8 (f32 sublane tile) -> aligned concat + MXU tiles.
    cin_p = -(-Cin // 8) * 8
    # Lane-dense layout: lane axis = flattened (N, H, W); channels on sublanes.
    x = jnp.transpose(x_nchw.astype(jnp.float32), (1, 0, 2, 3)).reshape(Cin, N * HW)
    if cin_p != Cin:
        x = jnp.concatenate([x, jnp.zeros((cin_p - Cin, N * HW), jnp.float32)], 0)

    w = weight.astype(jnp.float32)
    if cin_p != Cin:
        w = jnp.concatenate([w, jnp.zeros((Cout, cin_p - Cin, KH, KW), jnp.float32)], 1)
    # im2col-ordered (tap-major, channel-minor) weight matrix, bf16 MXU operand.
    w_mat = jnp.transpose(w, (0, 2, 3, 1)).reshape(Cout, KH * KW * cin_p)
    w_mat = w_mat.astype(jnp.bfloat16)

    g = gamma.reshape(Cout, 1).astype(jnp.float32)
    be = beta.reshape(Cout, 1).astype(jnp.float32)

    # ---- block-size selection -------------------------------------------
    # Batch block: largest divisor of N whose input block fits a small lane
    # budget and keeps the lane block 128-aligned (always true if it equals
    # the full flattened batch).
    b_blk = N
    for cand in range(N, 0, -1):
        if N % cand != 0:
            continue
        aligned = (cand == N) or ((cand * HW) % 128 == 0)
        fits = cin_p * cand * HW * 4 <= (4 << 20)
        if aligned and (fits or cand == 1):
            b_blk = cand
            break
    lblk = b_blk * HW
    nb = N // b_blk

    # Cout block: whole Cout when small; otherwise MXU-friendly tile.
    tc_c = Cout
    if Cout > 256:
        for cand in (256, 128, 64, 32, 16, 8):
            if Cout % cand == 0:
                tc_c = cand
                break
    nc = Cout // tc_c

    ph, pw = (KH - 1) // 2, (KW - 1) // 2
    kprime = KH * KW * cin_p

    # Size-aware im2col: materialize the patches slab only if it is small.
    slab_bytes = kprime * lblk * 6      # f32 taps + bf16 patches
    use_im2col = slab_bytes <= (8 << 20)

    # ---- precomputed 'same'-padding masks (resident in VMEM) -------------
    rr = jnp.arange(HW, dtype=jnp.int32) // W
    cc = jnp.arange(HW, dtype=jnp.int32) % W
    rows = []
    for dy in range(KH):
        for dx in range(KW):
            ody, odx = dy - ph, dx - pw
            rows.append((rr + ody >= 0) & (rr + ody < H) &
                        (cc + odx >= 0) & (cc + odx < W))
    mask = jnp.stack(rows, 0).astype(jnp.float32)          # (KH*KW, HW)
    mask = jnp.tile(mask, (1, b_blk))                       # (KH*KW, lblk)

    # ---- VMEM budget (v7x has 64 MiB; default scoped limit is 32 MiB) -----
    est = (2 * tc_c * N * HW * 4          # resident output block (+ buffer)
           + 2 * cin_p * lblk * 4         # double-buffered input
           + 2 * KH * KW * lblk * 4       # mask
           + 2 * tc_c * kprime * 2        # weights
           + (slab_bytes if use_im2col else 0)
           + 2 * tc_c * lblk * 4)         # conv temp / headroom
    vmem_limit = int(min(64 << 20, max(est + (4 << 20), 32 << 20)))

    kernel = functools.partial(
        _convblock_kernel, H=H, W=W, KH=KH, KW=KW, cin_p=cin_p, lblk=lblk,
        n_total=N * HW, eps=eps, use_im2col=use_im2col)

    # TODO(synk): for activations too large for a resident (tc_c, N*H*W) output
    # block, switch to a halo-tiled spatial grid with a two-phase BN finalize.
    out = pl.pallas_call(
        kernel,
        out_shape=jax.ShapeDtypeStruct((Cout, N * HW), jnp.float32),
        grid_spec=pltpu.PrefetchScalarGridSpec(
            num_scalar_prefetch=0,
            grid=(nc, nb),
            in_specs=[
                pl.BlockSpec((cin_p, lblk), lambda c, b: (0, b)),
                pl.BlockSpec((tc_c, kprime), lambda c, b: (c, 0)),
                pl.BlockSpec((KH * KW, lblk), lambda c, b: (0, 0)),
                pl.BlockSpec((tc_c, 1), lambda c, b: (c, 0)),
                pl.BlockSpec((tc_c, 1), lambda c, b: (c, 0)),
            ],
            out_specs=pl.BlockSpec((tc_c, N * HW), lambda c, b: (c, 0)),
            scratch_shapes=[pltpu.VMEM((tc_c, 1), jnp.float32),
                            pltpu.VMEM((tc_c, 1), jnp.float32)],
        ),
        compiler_params=pltpu.CompilerParams(
            dimension_semantics=("parallel", "arbitrary"),
            vmem_limit_bytes=vmem_limit),
    )(x, w_mat, mask, g, be)

    # Free-ish reshape + one transpose back to NCHW.
    return out.reshape(Cout, N, H, W).transpose(1, 0, 2, 3)


def _reference(x_nchw, weight, bias, gamma, beta, eps=1e-5):
    """Plain-JAX reference (conv + bias + training-mode BN + ReLU)."""
    y = lax.conv_general_dilated(
        x_nchw.astype(jnp.float32), weight.astype(jnp.float32),
        window_strides=(1, 1), padding="SAME",
        dimension_numbers=("NCHW", "OIHW", "NCHW"))
    y = y + bias.reshape(1, -1, 1, 1)
    mean = jnp.mean(y, axis=(0, 2, 3), keepdims=True)
    var = jnp.mean((y - mean) ** 2, axis=(0, 2, 3), keepdims=True)
    y = (y - mean) * lax.rsqrt(var + eps)
    y = y * gamma.reshape(1, -1, 1, 1) + beta.reshape(1, -1, 1, 1)
    return jnp.maximum(y, 0.0)


if __name__ == "__main__":
    # ConvBlock(in_channels=4, out_channels=8, kernel_size=3) — defaults:
    # stride=1, padding='same', activation='relu', norm='batch_norm'
    N, Cin, H, W = 2, 4, 16, 16
    Cout, K = 8, 3

    key = jax.random.PRNGKey(0)
    kx, kw, kb = jax.random.split(key, 3)

    x = jax.random.normal(kx, (N, Cin, H, W), dtype=jnp.float32)
    fan_in = Cin * K * K
    bound = 1.0 / (fan_in ** 0.5)
    weight = jax.random.uniform(kw, (Cout, Cin, K, K), jnp.float32, -bound, bound)
    bias = jax.random.uniform(kb, (Cout,), jnp.float32, -bound, bound)
    gamma = jnp.ones((Cout,), jnp.float32)    # BatchNorm2d default init
    beta = jnp.zeros((Cout,), jnp.float32)

    out = conv_block(x, weight, bias, gamma, beta)
    out = jax.block_until_ready(out)

    ref = _reference(x, weight, bias, gamma, beta)
    assert out.shape == (N, Cout, H, W)
    # bf16 MXU operands (f32 accumulation) -> slightly looser tolerance.
    assert jnp.allclose(out, ref, atol=2e-2, rtol=2e-2), "mismatch vs reference"

    print("KERNEL_OK")
</pallas_src>

<mosaic_0001>
module attributes {stable_mosaic.version = 11 : i64} {
  func.func @_convblock_kernel(%arg0: i32, %arg1: i32, %arg2: memref<8x512xf32, #tpu.memory_space<vmem>>, %arg3: memref<8x72xbf16, #tpu.memory_space<vmem>>, %arg4: memref<9x512xf32, #tpu.memory_space<vmem>>, %arg5: memref<8x1xf32, #tpu.memory_space<vmem>>, %arg6: memref<8x1xf32, #tpu.memory_space<vmem>>, %arg7: memref<8x512xf32, #tpu.memory_space<vmem>>, %arg8: memref<8x1xf32, #tpu.memory_space<vmem>>, %arg9: memref<8x1xf32, #tpu.memory_space<vmem>>) attributes {dimension_semantics = [#tpu.dimension_semantics<parallel>, #tpu.dimension_semantics<arbitrary>], iteration_bounds = array<i64: 1, 1>, scalar_prefetch = 0 : i64, scratch_operands = 2 : i64, tpu.core_type = #tpu.core_type<tc>, window_params = [{transform_indices = @transform_0, window_bounds = array<i64: 8, 512>}, {transform_indices = @transform_1, window_bounds = array<i64: 8, 72>}, {pipeline_mode = #tpu.pipeline_mode<synchronous>, transform_indices = @transform_2, window_bounds = array<i64: 9, 512>}, {transform_indices = @transform_3, window_bounds = array<i64: 8, 1>}, {transform_indices = @transform_4, window_bounds = array<i64: 8, 1>}, {transform_indices = @transform_5, window_bounds = array<i64: 8, 512>}]} {
    %c0 = arith.constant 0 : index
    %c0_0 = arith.constant 0 : index
    %0 = vector.load %arg2[%c0, %c0_0] : memref<8x512xf32, #tpu.memory_space<vmem>>, vector<8x512xf32>
    %c0_1 = arith.constant 0 : index
    %c0_2 = arith.constant 0 : index
    %1 = vector.load %arg4[%c0_1, %c0_2] : memref<9x512xf32, #tpu.memory_space<vmem>>, vector<9x512xf32>
    %c0_3 = arith.constant 0 : index
    %c0_4 = arith.constant 0 : index
    %2 = vector.load %arg3[%c0_3, %c0_4] : memref<8x72xbf16, #tpu.memory_space<vmem>>, vector<8x72xbf16>
    %c17_i32 = arith.constant 17 : i32
    %3 = tpu.dynamic_rotate %0 by %c17_i32 dim 1 : vector<8x512xf32>, i32 -> vector<8x512xf32>
    %4 = vector.extract_strided_slice %1 {offsets = [0, 0], sizes = [1, 512], strides = [1, 1]} : vector<9x512xf32> to vector<1x512xf32>
    %5 = vector.broadcast %4 : vector<1x512xf32> to vector<8x512xf32>
    %6 = arith.mulf %3, %5 : vector<8x512xf32>
    %c16_i32 = arith.constant 16 : i32
    %7 = tpu.dynamic_rotate %0 by %c16_i32 dim 1 : vector<8x512xf32>, i32 -> vector<8x512xf32>
    %8 = vector.extract_strided_slice %1 {offsets = [1, 0], sizes = [1, 512], strides = [1, 1]} : vector<9x512xf32> to vector<1x512xf32>
    %9 = vector.broadcast %8 : vector<1x512xf32> to vector<8x512xf32>
    %10 = arith.mulf %7, %9 : vector<8x512xf32>
    %c15_i32 = arith.constant 15 : i32
    %11 = tpu.dynamic_rotate %0 by %c15_i32 dim 1 : vector<8x512xf32>, i32 -> vector<8x512xf32>
    %12 = vector.extract_strided_slice %1 {offsets = [2, 0], sizes = [1, 512], strides = [1, 1]} : vector<9x512xf32> to vector<1x512xf32>
    %13 = vector.broadcast %12 : vector<1x512xf32> to vector<8x512xf32>
    %14 = arith.mulf %11, %13 : vector<8x512xf32>
    %c1_i32 = arith.constant 1 : i32
    %15 = tpu.dynamic_rotate %0 by %c1_i32 dim 1 : vector<8x512xf32>, i32 -> vector<8x512xf32>
    %16 = vector.extract_strided_slice %1 {offsets = [3, 0], sizes = [1, 512], strides = [1, 1]} : vector<9x512xf32> to vector<1x512xf32>
    %17 = vector.broadcast %16 : vector<1x512xf32> to vector<8x512xf32>
    %18 = arith.mulf %15, %17 : vector<8x512xf32>
    %19 = vector.extract_strided_slice %1 {offsets = [4, 0], sizes = [1, 512], strides = [1, 1]} : vector<9x512xf32> to vector<1x512xf32>
    %20 = vector.broadcast %19 : vector<1x512xf32> to vector<8x512xf32>
    %21 = arith.mulf %0, %20 : vector<8x512xf32>
    %c511_i32 = arith.constant 511 : i32
    %22 = tpu.dynamic_rotate %0 by %c511_i32 dim 1 : vector<8x512xf32>, i32 -> vector<8x512xf32>
    %23 = vector.extract_strided_slice %1 {offsets = [5, 0], sizes = [1, 512], strides = [1, 1]} : vector<9x512xf32> to vector<1x512xf32>
    %24 = vector.broadcast %23 : vector<1x512xf32> to vector<8x512xf32>
    %25 = arith.mulf %22, %24 : vector<8x512xf32>
    %c497_i32 = arith.constant 497 : i32
    %26 = tpu.dynamic_rotate %0 by %c497_i32 dim 1 : vector<8x512xf32>, i32 -> vector<8x512xf32>
    %27 = vector.extract_strided_slice %1 {offsets = [6, 0], sizes = [1, 512], strides = [1, 1]} : vector<9x512xf32> to vector<1x512xf32>
    %28 = vector.broadcast %27 : vector<1x512xf32> to vector<8x512xf32>
    %29 = arith.mulf %26, %28 : vector<8x512xf32>
    %c496_i32 = arith.constant 496 : i32
    %30 = tpu.dynamic_rotate %0 by %c496_i32 dim 1 : vector<8x512xf32>, i32 -> vector<8x512xf32>
    %31 = vector.extract_strided_slice %1 {offsets = [7, 0], sizes = [1, 512], strides = [1, 1]} : vector<9x512xf32> to vector<1x512xf32>
    %32 = vector.broadcast %31 : vector<1x512xf32> to vector<8x512xf32>
    %33 = arith.mulf %30, %32 : vector<8x512xf32>
    %c495_i32 = arith.constant 495 : i32
    %34 = tpu.dynamic_rotate %0 by %c495_i32 dim 1 : vector<8x512xf32>, i32 -> vector<8x512xf32>
    %35 = vector.extract_strided_slice %1 {offsets = [8, 0], sizes = [1, 512], strides = [1, 1]} : vector<9x512xf32> to vector<1x512xf32>
    %36 = vector.broadcast %35 : vector<1x512xf32> to vector<8x512xf32>
    %37 = arith.mulf %34, %36 : vector<8x512xf32>
    %38 = tpu.concatenate %6, %10, %14, %18, %21, %25, %29, %33, %37 in 0 : vector<8x512xf32>, vector<8x512xf32>, vector<8x512xf32>, vector<8x512xf32>, vector<8x512xf32>, vector<8x512xf32>, vector<8x512xf32>, vector<8x512xf32>, vector<8x512xf32> -> vector<72x512xf32>
    %39 = arith.truncf %38 : vector<72x512xf32> to vector<72x512xbf16>
    %cst = arith.constant dense<0.000000e+00> : vector<8x512xf32>
    %40 = tpu.matmul %2, %39, %cst {dimension_numbers = #tpu.dot_dimension_numbers<[1], [0], [0], [1], [0, 0, 1, 1], [], []>} : vector<8x72xbf16>, vector<72x512xbf16>, vector<8x512xf32> -> vector<8x512xf32>
    %c512_i32 = arith.constant 512 : i32
    %41 = arith.muli %arg1, %c512_i32 : i32
    %42 = tpu.assume_multiple %41, 128 : i32
    %c0_5 = arith.constant 0 : index
    %43 = arith.index_cast %42 : i32 to index
    %44 = vector.load %arg7[%c0_5, %43] : memref<8x512xf32, #tpu.memory_space<vmem>>, vector<8x512xf32>
    tpu.vector_store %arg7[%c0_5, %43], %40 {strides = array<i32>} : memref<8x512xf32, #tpu.memory_space<vmem>>, vector<8x512xf32>,
    %c0_i32 = arith.constant 0 : i32
    %45 = arith.cmpi eq, %arg1, %c0_i32 : i32
    %46 = arith.extui %45 : i1 to i32
    %c0_i32_6 = arith.constant 0 : i32
    %47 = arith.cmpi ne, %46, %c0_i32_6 : i32
    scf.if %47 {
      %cst_19 = arith.constant 0.000000e+00 : f32
      %62 = vector.broadcast %cst_19 : f32 to vector<8x1xf32>
      %c0_20 = arith.constant 0 : index
      %c0_21 = arith.constant 0 : index
      %63 = vector.load %arg8[%c0_20, %c0_21] : memref<8x1xf32, #tpu.memory_space<vmem>>, vector<8x1xf32>
      tpu.vector_store %arg8[%c0_20, %c0_21], %62 {strides = array<i32>} : memref<8x1xf32, #tpu.memory_space<vmem>>, vector<8x1xf32>,
      %cst_22 = arith.constant 0.000000e+00 : f32
      %64 = vector.broadcast %cst_22 : f32 to vector<8x1xf32>
      %c0_23 = arith.constant 0 : index
      %c0_24 = arith.constant 0 : index
      %65 = vector.load %arg9[%c0_23, %c0_24] : memref<8x1xf32, #tpu.memory_space<vmem>>, vector<8x1xf32>
      tpu.vector_store %arg9[%c0_23, %c0_24], %64 {strides = array<i32>} : memref<8x1xf32, #tpu.memory_space<vmem>>, vector<8x1xf32>,
    } else {
    }
    %c0_7 = arith.constant 0 : index
    %c0_8 = arith.constant 0 : index
    %48 = vector.load %arg8[%c0_7, %c0_8] : memref<8x1xf32, #tpu.memory_space<vmem>>, vector<8x1xf32>
    %cst_9 = arith.constant dense<0.000000e+00> : vector<8xf32>
    %49 = vector.multi_reduction <add>, %40, %cst_9 [1] : vector<8x512xf32> to vector<8xf32>
    %50 = vector.shape_cast %49 : vector<8xf32> to vector<8x1xf32>
    %51 = arith.addf %48, %50 : vector<8x1xf32>
    %c0_10 = arith.constant 0 : index
    %c0_11 = arith.constant 0 : index
    %52 = vector.load %arg8[%c0_10, %c0_11] : memref<8x1xf32, #tpu.memory_space<vmem>>, vector<8x1xf32>
    tpu.vector_store %arg8[%c0_10, %c0_11], %51 {strides = array<i32>} : memref<8x1xf32, #tpu.memory_space<vmem>>, vector<8x1xf32>,
    %c0_12 = arith.constant 0 : index
    %c0_13 = arith.constant 0 : index
    %53 = vector.load %arg9[%c0_12, %c0_13] : memref<8x1xf32, #tpu.memory_space<vmem>>, vector<8x1xf32>
    %54 = arith.mulf %40, %40 : vector<8x512xf32>
    %cst_14 = arith.constant dense<0.000000e+00> : vector<8xf32>
    %55 = vector.multi_reduction <add>, %54, %cst_14 [1] : vector<8x512xf32> to vector<8xf32>
    %56 = vector.shape_cast %55 : vector<8xf32> to vector<8x1xf32>
    %57 = arith.addf %53, %56 : vector<8x1xf32>
    %c0_15 = arith.constant 0 : index
    %c0_16 = arith.constant 0 : index
    %58 = vector.load %arg9[%c0_15, %c0_16] : memref<8x1xf32, #tpu.memory_space<vmem>>, vector<8x1xf32>
    tpu.vector_store %arg9[%c0_15, %c0_16], %57 {strides = array<i32>} : memref<8x1xf32, #tpu.memory_space<vmem>>, vector<8x1xf32>,
    %c0_i32_17 = arith.constant 0 : i32
    %59 = arith.cmpi eq, %arg1, %c0_i32_17 : i32
    %60 = arith.extui %59 : i1 to i32
    %c0_i32_18 = arith.constant 0 : i32
    %61 = arith.cmpi ne, %60, %c0_i32_18 : i32
    scf.if %61 {
      %c0_19 = arith.constant 0 : index
      %c0_20 = arith.constant 0 : index
      %62 = vector.load %arg8[%c0_19, %c0_20] : memref<8x1xf32, #tpu.memory_space<vmem>>, vector<8x1xf32>
      %cst_21 = arith.constant 5.120000e+02 : f32
      %63 = vector.broadcast %cst_21 : f32 to vector<8x1xf32>
      %64 = arith.divf %62, %63 : vector<8x1xf32>
      %c0_22 = arith.constant 0 : index
      %c0_23 = arith.constant 0 : index
      %65 = vector.load %arg9[%c0_22, %c0_23] : memref<8x1xf32, #tpu.memory_space<vmem>>, vector<8x1xf32>
      %cst_24 = arith.constant 5.120000e+02 : f32
      %66 = vector.broadcast %cst_24 : f32 to vector<8x1xf32>
      %67 = arith.divf %65, %66 : vector<8x1xf32>
      %68 = arith.mulf %64, %64 : vector<8x1xf32>
      %69 = arith.subf %67, %68 : vector<8x1xf32>
      %cst_25 = arith.constant 0.000000e+00 : f32
      %70 = vector.broadcast %cst_25 : f32 to vector<8x1xf32>
      %71 = arith.maximumf %69, %70 : vector<8x1xf32>
      %c0_26 = arith.constant 0 : index
      %c0_27 = arith.constant 0 : index
      %72 = vector.load %arg5[%c0_26, %c0_27] : memref<8x1xf32, #tpu.memory_space<vmem>>, vector<8x1xf32>
      %cst_28 = arith.constant 9.99999974E-6 : f32
      %73 = vector.broadcast %cst_28 : f32 to vector<8x1xf32>
      %74 = arith.addf %71, %73 : vector<8x1xf32>
      %75 = math.rsqrt %74 : vector<8x1xf32>
      %76 = arith.mulf %72, %75 : vector<8x1xf32>
      %c0_29 = arith.constant 0 : index
      %c0_30 = arith.constant 0 : index
      %77 = vector.load %arg6[%c0_29, %c0_30] : memref<8x1xf32, #tpu.memory_space<vmem>>, vector<8x1xf32>
      %78 = arith.mulf %64, %76 : vector<8x1xf32>
      %79 = arith.subf %77, %78 : vector<8x1xf32>
      %c0_31 = arith.constant 0 : index
      %c0_32 = arith.constant 0 : index
      %80 = vector.load %arg7[%c0_31, %c0_32] : memref<8x512xf32, #tpu.memory_space<vmem>>, vector<8x512xf32>
      %81 = vector.broadcast %76 : vector<8x1xf32> to vector<8x512xf32>
      %82 = arith.mulf %80, %81 : vector<8x512xf32>
      %83 = vector.broadcast %79 : vector<8x1xf32> to vector<8x512xf32>
      %84 = arith.addf %82, %83 : vector<8x512xf32>
      %cst_33 = arith.constant 0.000000e+00 : f32
      %85 = vector.broadcast %cst_33 : f32 to vector<8x512xf32>
      %86 = arith.maximumf %84, %85 : vector<8x512xf32>
      %c0_34 = arith.constant 0 : index
      %c0_35 = arith.constant 0 : index
      %87 = vector.load %arg7[%c0_34, %c0_35] : memref<8x512xf32, #tpu.memory_space<vmem>>, vector<8x512xf32>
      tpu.vector_store %arg7[%c0_34, %c0_35], %86 {strides = array<i32>} : memref<8x512xf32, #tpu.memory_space<vmem>>, vector<8x512xf32>,
    } else {
    }
    return
  }
  func.func @transform_0(%arg0: i32, %arg1: i32) -> (i32, i32) {
    %c0_i32 = arith.constant 0 : i32
    %c0_i32_0 = arith.constant 0 : i32
    return %c0_i32, %arg1 : i32, i32
  }
  func.func @transform_1(%arg0: i32, %arg1: i32) -> (i32, i32) {
    %c0_i32 = arith.constant 0 : i32
    %c0_i32_0 = arith.constant 0 : i32
    return %arg0, %c0_i32 : i32, i32
  }
  func.func @transform_2(%arg0: i32, %arg1: i32) -> (i32, i32) {
    %c0_i32 = arith.constant 0 : i32
    %c0_i32_0 = arith.constant 0 : i32
    %c0_i32_1 = arith.constant 0 : i32
    return %c0_i32, %c0_i32_0 : i32, i32
  }
  func.func @transform_3(%arg0: i32, %arg1: i32) -> (i32, i32) {
    %c0_i32 = arith.constant 0 : i32
    %c0_i32_0 = arith.constant 0 : i32
    return %arg0, %c0_i32 : i32, i32
  }
  func.func @transform_4(%arg0: i32, %arg1: i32) -> (i32, i32) {
    %c0_i32 = arith.constant 0 : i32
    %c0_i32_0 = arith.constant 0 : i32
    return %arg0, %c0_i32 : i32, i32
  }
  func.func @transform_5(%arg0: i32, %arg1: i32) -> (i32, i32) {
    %c0_i32 = arith.constant 0 : i32
    %c0_i32_0 = arith.constant 0 : i32
    return %arg0, %c0_i32 : i32, i32
  }
}

</mosaic_0001>

<llo_original>
// kernel: tpu_custom_call.1
$region0: #{tpu_custom_call.1}
  #allocation0 [shape = 'u32[]', space=smem, size = 0x4, offset = 0x4, fixed_abs, tag = 'smem constant byte address 0x4 - core index']
  #allocation1 [shape = 'u32[144,128]{1,0:T(1,128)}', space=vmem, size = 0x12000, scoped, tag = 'internal scratch']
  #allocation2 [shape = 'f32[8,1]{1,0:T(8,128)}', space=vmem, size = 0x1000, scoped, tag = 'scratch operand']
  #allocation3 [shape = 'f32[8,1]{1,0:T(8,128)}', space=vmem, size = 0x1000, scoped, tag = 'scratch operand']
  %s0 = inlined_call_operand.hbm [shape: f32[8,512], index: 0, kind: input, shape index: {}]
  %s1 = inlined_call_operand.vmem [shape: bf16[8,72], index: 1, kind: input, shape index: {}]
  %s2 = inlined_call_operand.hbm [shape: f32[9,512], index: 2, kind: input, shape index: {}]
  %s3 = inlined_call_operand.vmem [shape: f32[8,1], index: 3, kind: input, shape index: {}]
  %s4 = inlined_call_operand.vmem [shape: f32[8,1], index: 4, kind: input, shape index: {}]
  %s5 = inlined_call_operand.hbm [shape: f32[8,512], index: 5, kind: output, shape index: {}]
  %s6 = sld [smem:[#allocation0]]
  $region46: #{tpu_custom_call.1} parent=0
    _
  %s8 = ssub.s32 1, %s6
  %s9 = scalar_select 0, %s8, %s6
  $region1: #{tpu_custom_call.1} parent=0
    #allocation4 [shape = 'u8[16384]{0}', space=vmem, size = 0x4000, scoped, tag = 'input window, operand 0, single buffered']
    #allocation5 [shape = 's32[1]{0}', space=sflag, size = 0x4, scoped, tag = 'scoped memory for tpu_custom_call.1']
    #allocation6 [shape = 's32[1]{0}', space=sflag, size = 0x4, scoped, tag = 'scoped memory for tpu_custom_call.1']
    #allocation7 [shape = 'u8[32768]{0}', space=vmem, size = 0x8000, scoped, tag = 'input window, operand 2, single buffered']
    #allocation8 [shape = 's32[1]{0}', space=sflag, size = 0x4, scoped, tag = 'scoped memory for tpu_custom_call.1']
    #allocation9 [shape = 'u8[16384]{0}', space=vmem, size = 0x4000, scoped, tag = 'output window, operand 0, single buffered']
    %10 = vsyncpa [#allocation5], 0
    %11 = vsyncpa [#allocation8], 0
    %12 = vsyncpa [#allocation6], 0
    // Predicated region
    $region2: #{tpu_custom_call.1} parent=1 // pred_check
      _
    $region3: #{tpu_custom_call.1} parent=1 // pred_check_branch
      %14 = sbr.rel (0) target = $region5
    $region4: #{tpu_custom_call.1} parent=1 // pred_region
      %s16 = ssub.s32 512, 512
      %17 = vsyncadd [#allocation5], %s16
      %s19 = sshll.u32 [#allocation4], 4
      %s20 = int_to_ptr.vmem [resolvable:$true] %s19
      %22 = dma.hbm_to_vmem [thread:$0]  %s0, 512, %s20, [#allocation5]
    $region5: #{tpu_custom_call.1} parent=1 // pred_fallthru
      _
    // Predicated region
    $region6: #{tpu_custom_call.1} parent=1 // pred_check
      _
    $region7: #{tpu_custom_call.1} parent=1 // pred_check_branch
      %24 = sbr.rel (0) target = $region9
    $region8: #{tpu_custom_call.1} parent=1 // pred_region
      _
    $region9: #{tpu_custom_call.1} parent=1 // pred_fallthru
      _
    // Predicated region
    $region10: #{tpu_custom_call.1} parent=1 // pred_check
      _
    $region11: #{tpu_custom_call.1} parent=1 // pred_check_branch
      %26 = sbr.rel (0) target = $region13
    $region12: #{tpu_custom_call.1} parent=1 // pred_region
      %s28 = ssub.s32 1024, 1024
      %29 = vsyncadd [#allocation8], %s28
      %s30 = sshll.u32 [#allocation7], 4
      %s31 = int_to_ptr.vmem [resolvable:$true] %s30
      %36 = dma.hbm_to_vmem [thread:$0]  %s2, 1024, %s31, [#allocation8], 512, 512, 32
    $region13: #{tpu_custom_call.1} parent=1 // pred_fallthru
      _
    // Predicated region
    $region14: #{tpu_custom_call.1} parent=1 // pred_check
      _
    $region15: #{tpu_custom_call.1} parent=1 // pred_check_branch
      %38 = sbr.rel (0) target = $region17
    $region16: #{tpu_custom_call.1} parent=1 // pred_region
      _
    $region17: #{tpu_custom_call.1} parent=1 // pred_fallthru
      _
    // Predicated region
    $region18: #{tpu_custom_call.1} parent=1 // pred_check
      _
    $region19: #{tpu_custom_call.1} parent=1 // pred_check_branch
      %40 = sbr.rel (0) target = $region21
    $region20: #{tpu_custom_call.1} parent=1 // pred_region
      _
    $region21: #{tpu_custom_call.1} parent=1 // pred_fallthru
      _
    // Predicated region
    $region22: #{tpu_custom_call.1} parent=1 // pred_check
      _
    $region23: #{tpu_custom_call.1} parent=1 // pred_check_branch
      %42 = sbr.rel (0) target = $region25
    $region24: #{tpu_custom_call.1} parent=1 // pred_region
      %43 = dma.done [#allocation5], 512
    $region25: #{tpu_custom_call.1} parent=1 // pred_fallthru
      _
    // Predicated region
    $region26: #{tpu_custom_call.1} parent=1 // pred_check
      _
    $region27: #{tpu_custom_call.1} parent=1 // pred_check_branch
      %45 = sbr.rel (0) target = $region29
    $region28: #{tpu_custom_call.1} parent=1 // pred_region
      %46 = dma.done [#allocation8], 1024
    $region29: #{tpu_custom_call.1} parent=1 // pred_fallthru
      _
    %v48 = vld [vmem:[#allocation4] sm:$0xff]
    %v49 = vld [vmem:[#allocation4 + $0x8] sm:$0xff]
    %v50 = vld [vmem:[#allocation4 + $0x10] sm:$0xff]
    %v51 = vld [vmem:[#allocation4 + $0x18] sm:$0xff]
    %v52 = vld [vmem:[#allocation7] sm:$0xff]
    %v53 = vld [vmem:[#allocation7 + $0x8] sm:$0xff]
    %v54 = vld [vmem:[#allocation7 + $0x10] sm:$0xff]
    %v55 = vld [vmem:[#allocation7 + $0x18] sm:$0xff]
    %v56 = vld [vmem:[#allocation7 + $0x20] sm:$0x1]
    %v57 = vld [vmem:[#allocation7 + $0x28] sm:$0x1]
    %v58 = vld [vmem:[#allocation7 + $0x30] sm:$0x1]
    %v59 = vld [vmem:[#allocation7 + $0x38] sm:$0x1]
    %v60 = vld [vmem:[%s1] sm:$0xf]
    %61 = vrot.lane.b32.xlu0 %v48, 17
    %v62 = vpop.permute.xlu0 %61
    %63 = vrot.lane.b32.xlu0 %v49, 17
    %v64 = vpop.permute.xlu0 %63
    %65 = vrot.lane.b32.xlu0 %v50, 17
    %v66 = vpop.permute.xlu0 %65
    %67 = vrot.lane.b32.xlu0 %v51, 17
    %v68 = vpop.permute.xlu0 %67
    %v69 = vlaneseq
    %v70 = vand.u32 %v69, 127
    %vm71 = vcmp.lt.s32.totalorder %v70, 17
    %v72 = vsel %vm71, %v66, %v68
    %v73 = vsel %vm71, %v64, %v66
    %v74 = vsel %vm71, %v62, %v64
    %v75 = vsel %vm71, %v68, %v62
    %v76 = vlaneseq
    %v77 = vshrl.u32 %v76, 7
    %v78 = vsub.s32 0, %v77
    %v79 = vrot.slane %v52, %v78
    %v80 = vlaneseq
    %v81 = vshrl.u32 %v80, 7
    %v82 = vsub.s32 0, %v81
    %v83 = vrot.slane %v53, %v82
    %v84 = vlaneseq
    %v85 = vshrl.u32 %v84, 7
    %v86 = vsub.s32 0, %v85
    %v87 = vrot.slane %v54, %v86
    %v88 = vlaneseq
    %v89 = vshrl.u32 %v88, 7
    %v90 = vsub.s32 0, %v89
    %v91 = vrot.slane %v55, %v90
    %v92 = vmul.f32 %v75, %v79
    %v93 = vmul.f32 %v74, %v83
    %v94 = vmul.f32 %v73, %v87
    %v95 = vmul.f32 %v72, %v91
    %96 = vrot.lane.b32.xlu0 %v48, 16
    %v97 = vpop.permute.xlu0 %96
    %98 = vrot.lane.b32.xlu0 %v49, 16
    %v99 = vpop.permute.xlu0 %98
    %100 = vrot.lane.b32.xlu0 %v50, 16
    %v101 = vpop.permute.xlu0 %100
    %102 = vrot.lane.b32.xlu0 %v51, 16
    %v103 = vpop.permute.xlu0 %102
    %vm104 = vcmp.lt.s32.totalorder %v70, 16
    %v105 = vsel %vm104, %v101, %v103
    %v106 = vsel %vm104, %v99, %v101
    %v107 = vsel %vm104, %v97, %v99
    %v108 = vsel %vm104, %v103, %v97
    %v109 = vlaneseq
    %v110 = vshrl.u32 %v109, 7
    %v111 = vsub.s32 1, %v110
    %v112 = vrot.slane %v52, %v111
    %v113 = vlaneseq
    %v114 = vshrl.u32 %v113, 7
    %v115 = vsub.s32 1, %v114
    %v116 = vrot.slane %v53, %v115
    %v117 = vlaneseq
    %v118 = vshrl.u32 %v117, 7
    %v119 = vsub.s32 1, %v118
    %v120 = vrot.slane %v54, %v119
    %v121 = vlaneseq
    %v122 = vshrl.u32 %v121, 7
    %v123 = vsub.s32 1, %v122
    %v124 = vrot.slane %v55, %v123
    %v125 = vmul.f32 %v108, %v112
    %v126 = vmul.f32 %v107, %v116
    %v127 = vmul.f32 %v106, %v120
    %v128 = vmul.f32 %v105, %v124
    %129 = vrot.lane.b32.xlu0 %v48, 15
    %v130 = vpop.permute.xlu0 %129
    %131 = vrot.lane.b32.xlu0 %v49, 15
    %v132 = vpop.permute.xlu0 %131
    %133 = vrot.lane.b32.xlu0 %v50, 15
    %v134 = vpop.permute.xlu0 %133
    %135 = vrot.lane.b32.xlu0 %v51, 15
    %v136 = vpop.permute.xlu0 %135
    %vm137 = vcmp.lt.s32.totalorder %v70, 15
    %v138 = vsel %vm137, %v134, %v136
    %v139 = vsel %vm137, %v132, %v134
    %v140 = vsel %vm137, %v130, %v132
    %v141 = vsel %vm137, %v136, %v130
    %v142 = vlaneseq
    %v143 = vshrl.u32 %v142, 7
    %v144 = vsub.s32 2, %v143
    %v145 = vrot.slane %v52, %v144
    %v146 = vlaneseq
    %v147 = vshrl.u32 %v146, 7
    %v148 = vsub.s32 2, %v147
    %v149 = vrot.slane %v53, %v148
    %v150 = vlaneseq
    %v151 = vshrl.u32 %v150, 7
    %v152 = vsub.s32 2, %v151
    %v153 = vrot.slane %v54, %v152
    %v154 = vlaneseq
    %v155 = vshrl.u32 %v154, 7
    %v156 = vsub.s32 2, %v155
    %v157 = vrot.slane %v55, %v156
    %v158 = vmul.f32 %v141, %v145
    %v159 = vmul.f32 %v140, %v149
    %v160 = vmul.f32 %v139, %v153
    %v161 = vmul.f32 %v138, %v157
    %162 = vrot.lane.b32.xlu0 %v48, 1
    %v163 = vpop.permute.xlu0 %162
    %164 = vrot.lane.b32.xlu0 %v49, 1
    %v165 = vpop.permute.xlu0 %164
    %166 = vrot.lane.b32.xlu0 %v50, 1
    %v167 = vpop.permute.xlu0 %166
    %168 = vrot.lane.b32.xlu0 %v51, 1
    %v169 = vpop.permute.xlu0 %168
    %vm170 = vcmp.lt.s32.totalorder %v70, 1
    %v171 = vsel %vm170, %v167, %v169
    %v172 = vsel %vm170, %v165, %v167
    %v173 = vsel %vm170, %v163, %v165
    %v174 = vsel %vm170, %v169, %v163
    %v175 = vlaneseq
    %v176 = vshrl.u32 %v175, 7
    %v177 = vsub.s32 3, %v176
    %v178 = vrot.slane %v52, %v177
    %v179 = vlaneseq
    %v180 = vshrl.u32 %v179, 7
    %v181 = vsub.s32 3, %v180
    %v182 = vrot.slane %v53, %v181
    %v183 = vlaneseq
    %v184 = vshrl.u32 %v183, 7
    %v185 = vsub.s32 3, %v184
    %v186 = vrot.slane %v54, %v185
    %v187 = vlaneseq
    %v188 = vshrl.u32 %v187, 7
    %v189 = vsub.s32 3, %v188
    %v190 = vrot.slane %v55, %v189
    %v191 = vmul.f32 %v174, %v178
    %v192 = vmul.f32 %v173, %v182
    %v193 = vmul.f32 %v172, %v186
    %v194 = vmul.f32 %v171, %v190
    %v195 = vlaneseq
    %v196 = vshrl.u32 %v195, 7
    %v197 = vsub.s32 4, %v196
    %v198 = vrot.slane %v52, %v197
    %v199 = vlaneseq
    %v200 = vshrl.u32 %v199, 7
    %v201 = vsub.s32 4, %v200
    %v202 = vrot.slane %v53, %v201
    %v203 = vlaneseq
    %v204 = vshrl.u32 %v203, 7
    %v205 = vsub.s32 4, %v204
    %v206 = vrot.slane %v54, %v205
    %v207 = vlaneseq
    %v208 = vshrl.u32 %v207, 7
    %v209 = vsub.s32 4, %v208
    %v210 = vrot.slane %v55, %v209
    %v211 = vmul.f32 %v48, %v198
    %v212 = vmul.f32 %v49, %v202
    %v213 = vmul.f32 %v50, %v206
    %v214 = vmul.f32 %v51, %v210
    %215 = vrot.lane.b32.xlu0 %v48, 127
    %v216 = vpop.permute.xlu0 %215
    %217 = vrot.lane.b32.xlu0 %v49, 127
    %v218 = vpop.permute.xlu0 %217
    %219 = vrot.lane.b32.xlu0 %v50, 127
    %v220 = vpop.permute.xlu0 %219
    %221 = vrot.lane.b32.xlu0 %v51, 127
    %v222 = vpop.permute.xlu0 %221
    %vm223 = vcmp.lt.s32.totalorder %v70, 127
    %v224 = vsel %vm223, %v220, %v222
    %v225 = vsel %vm223, %v218, %v220
    %v226 = vsel %vm223, %v216, %v218
    %v227 = vsel %vm223, %v222, %v216
    %v228 = vlaneseq
    %v229 = vshrl.u32 %v228, 7
    %v230 = vsub.s32 5, %v229
    %v231 = vrot.slane %v52, %v230
    %v232 = vlaneseq
    %v233 = vshrl.u32 %v232, 7
    %v234 = vsub.s32 5, %v233
    %v235 = vrot.slane %v53, %v234
    %v236 = vlaneseq
    %v237 = vshrl.u32 %v236, 7
    %v238 = vsub.s32 5, %v237
    %v239 = vrot.slane %v54, %v238
    %v240 = vlaneseq
    %v241 = vshrl.u32 %v240, 7
    %v242 = vsub.s32 5, %v241
    %v243 = vrot.slane %v55, %v242
    %v244 = vmul.f32 %v226, %v231
    %v245 = vmul.f32 %v225, %v235
    %v246 = vmul.f32 %v224, %v239
    %v247 = vmul.f32 %v227, %v243
    %248 = vrot.lane.b32.xlu0 %v48, 113
    %v249 = vpop.permute.xlu0 %248
    %250 = vrot.lane.b32.xlu0 %v49, 113
    %v251 = vpop.permute.xlu0 %250
    %252 = vrot.lane.b32.xlu0 %v50, 113
    %v253 = vpop.permute.xlu0 %252
    %254 = vrot.lane.b32.xlu0 %v51, 113
    %v255 = vpop.permute.xlu0 %254
    %vm256 = vcmp.lt.s32.totalorder %v70, 113
    %v257 = vsel %vm256, %v253, %v255
    %v258 = vsel %vm256, %v251, %v253
    %v259 = vsel %vm256, %v249, %v251
    %v260 = vsel %vm256, %v255, %v249
    %v261 = vlaneseq
    %v262 = vshrl.u32 %v261, 7
    %v263 = vsub.s32 6, %v262
    %v264 = vrot.slane %v52, %v263
    %v265 = vlaneseq
    %v266 = vshrl.u32 %v265, 7
    %v267 = vsub.s32 6, %v266
    %v268 = vrot.slane %v53, %v267
    %v269 = vlaneseq
    %v270 = vshrl.u32 %v269, 7
    %v271 = vsub.s32 6, %v270
    %v272 = vrot.slane %v54, %v271
    %v273 = vlaneseq
    %v274 = vshrl.u32 %v273, 7
    %v275 = vsub.s32 6, %v274
    %v276 = vrot.slane %v55, %v275
    %v277 = vmul.f32 %v259, %v264
    %v278 = vmul.f32 %v258, %v268
    %v279 = vmul.f32 %v257, %v272
    %v280 = vmul.f32 %v260, %v276
    %281 = vrot.lane.b32.xlu0 %v48, 112
    %v282 = vpop.permute.xlu0 %281
    %283 = vrot.lane.b32.xlu0 %v49, 112
    %v284 = vpop.permute.xlu0 %283
    %285 = vrot.lane.b32.xlu0 %v50, 112
    %v286 = vpop.permute.xlu0 %285
    %287 = vrot.lane.b32.xlu0 %v51, 112
    %v288 = vpop.permute.xlu0 %287
    %vm289 = vcmp.lt.s32.totalorder %v70, 112
    %v290 = vsel %vm289, %v286, %v288
    %v291 = vsel %vm289, %v284, %v286
    %v292 = vsel %vm289, %v282, %v284
    %v293 = vsel %vm289, %v288, %v282
    %v294 = vlaneseq
    %v295 = vshrl.u32 %v294, 7
    %v296 = vsub.s32 7, %v295
    %v297 = vrot.slane %v52, %v296
    %v298 = vlaneseq
    %v299 = vshrl.u32 %v298, 7
    %v300 = vsub.s32 7, %v299
    %v301 = vrot.slane %v53, %v300
    %v302 = vlaneseq
    %v303 = vshrl.u32 %v302, 7
    %v304 = vsub.s32 7, %v303
    %v305 = vrot.slane %v54, %v304
    %v306 = vlaneseq
    %v307 = vshrl.u32 %v306, 7
    %v308 = vsub.s32 7, %v307
    %v309 = vrot.slane %v55, %v308
    %v310 = vmul.f32 %v292, %v297
    %v311 = vmul.f32 %v291, %v301
    %v312 = vmul.f32 %v290, %v305
    %v313 = vmul.f32 %v293, %v309
    %314 = vrot.lane.b32.xlu0 %v48, 111
    %v315 = vpop.permute.xlu0 %314
    %316 = vrot.lane.b32.xlu0 %v49, 111
    %v317 = vpop.permute.xlu0 %316
    %318 = vrot.lane.b32.xlu0 %v50, 111
    %v319 = vpop.permute.xlu0 %318
    %320 = vrot.lane.b32.xlu0 %v51, 111
    %v321 = vpop.permute.xlu0 %320
    %vm322 = vcmp.lt.s32.totalorder %v70, 111
    %v323 = vsel %vm322, %v319, %v321
    %v324 = vsel %vm322, %v317, %v319
    %v325 = vsel %vm322, %v315, %v317
    %v326 = vsel %vm322, %v321, %v315
    %v327 = vlaneseq
    %v328 = vshrl.u32 %v327, 7
    %v329 = vsub.s32 0, %v328
    %v330 = vrot.slane %v56, %v329
    %v331 = vlaneseq
    %v332 = vshrl.u32 %v331, 7
    %v333 = vsub.s32 0, %v332
    %v334 = vrot.slane %v57, %v333
    %v335 = vlaneseq
    %v336 = vshrl.u32 %v335, 7
    %v337 = vsub.s32 0, %v336
    %v338 = vrot.slane %v58, %v337
    %v339 = vlaneseq
    %v340 = vshrl.u32 %v339, 7
    %v341 = vsub.s32 0, %v340
    %v342 = vrot.slane %v59, %v341
    %v343 = vmul.f32 %v325, %v330
    %v344 = vmul.f32 %v324, %v334
    %v345 = vmul.f32 %v323, %v338
    %v346 = vmul.f32 %v326, %v342
    %v347 = vpack.c.bf16 %v125, %v92
    %v348 = vpack.c.bf16 %v126, %v93
    %v349 = vpack.c.bf16 %v127, %v94
    %v350 = vpack.c.bf16 %v128, %v95
    %v351 = vpack.c.bf16 %v191, %v158
    %v352 = vpack.c.bf16 %v192, %v159
    %v353 = vpack.c.bf16 %v193, %v160
    %v354 = vpack.c.bf16 %v194, %v161
    %v355 = vpack.c.bf16 %v244, %v211
    %v356 = vpack.c.bf16 %v245, %v212
    %v357 = vpack.c.bf16 %v246, %v213
    %v358 = vpack.c.bf16 %v247, %v214
    %v359 = vpack.c.bf16 %v310, %v277
    %v360 = vpack.c.bf16 %v311, %v278
    %v361 = vpack.c.bf16 %v312, %v279
    %v362 = vpack.c.bf16 %v313, %v280
    %v363 = vpack.c.bf16 %v343, %v343
    %v364 = vpack.c.bf16 %v344, %v344
    %v365 = vpack.c.bf16 %v345, %v345
    %v366 = vpack.c.bf16 %v346, %v346
    %vm367 = vcmask 588800
    %v369 = vsel %vm367, %v60, 0
    %vm371 = vcmask 1043456
    %v373 = vsel %vm371, %v363, 0
    %v376 = vsel %vm371, %v364, 0
    %v379 = vsel %vm371, %v365, 0
    %v382 = vsel %vm371, %v366, 0
    %384 = vmatprep.subr.bf16.mxu0 0
    %385 = vmatpush1.bf16.msra.mxu0 0
    %386 = vmatprep.subr.bf16.mxu0 0
    %387 = vmatpush1.bf16.msra.mxu0 0
    %388 = vmatprep.subr.bf16.mxu0 0
    %389 = vmatpush1.bf16.msra.mxu0 0
    %390 = vmatprep.subr.bf16.mxu0 %v376
    %391 = vmatpush1.bf16.msra.mxu0 %v373
    %392 = vmatprep.subr.bf16.mxu0 %v360
    %393 = vmatpush1.bf16.msra.mxu0 %v359
    %394 = vmatprep.subr.bf16.mxu0 %v356
    %395 = vmatpush1.bf16.msra.mxu0 %v355
    %396 = vmatprep.subr.bf16.mxu0 %v352
    %397 = vmatpush1.bf16.msra.mxu0 %v351
    %398 = vmatprep.subr.bf16.mxu0 %v348
    %399 = vmatpush1.bf16.msra.mxu0 %v347
    %400 = vmatprep.subr.bf16.mxu0 0
    %401 = vmatpush2.bf16.msra.mxu0 0
    %402 = vmatprep.subr.bf16.mxu0 0
    %403 = vmatpush2.bf16.msra.mxu0 0
    %404 = vmatprep.subr.bf16.mxu0 0
    %405 = vmatpush2.bf16.msra.mxu0 0
    %406 = vmatprep.subr.bf16.mxu0 0
    %407 = vmatpush2.bf16.msra.mxu0 0
    %408 = vmatprep.subr.bf16.mxu0 0
    %409 = vmatpush2.bf16.msra.mxu0 0
    %410 = vmatprep.subr.bf16.mxu0 0
    %411 = vmatpush2.bf16.msra.mxu0 0
    %412 = vmatprep.subr.bf16.mxu0 0
    %413 = vmatpush2.bf16.msra.mxu0 0
    %414 = vmatprep.subr.bf16.mxu0 0
    %415 = vmatpush2.bf16.msra.mxu0 0
    %416 = vmatprep.mubr.bf16.mxu0 0
    %417 = vmatmul.mubr.bf16.gmra.mxu0 %v369
    %v418 = vpop.f32.mrf.mxu0
    %v419 = vadd.f32 0.0, %v418
    %v420 = vpop.f32.mrf.mxu0
    %v421 = vadd.f32 0.0, %v420
    %v422 = vpop.f32.mrf.mxu0
    %v423 = vpop.f32.mrf.mxu0
    %424 = vdwg.mxu0
    %425 = vmatprep.subr.bf16.mxu0 0
    %426 = vmatpush1.bf16.msra.mxu0 0
    %427 = vmatprep.subr.bf16.mxu0 0
    %428 = vmatpush1.bf16.msra.mxu0 0
    %429 = vmatprep.subr.bf16.mxu0 0
    %430 = vmatpush1.bf16.msra.mxu0 0
    %431 = vmatprep.subr.bf16.mxu0 %v382
    %432 = vmatpush1.bf16.msra.mxu0 %v379
    %433 = vmatprep.subr.bf16.mxu0 %v362
    %434 = vmatpush1.bf16.msra.mxu0 %v361
    %435 = vmatprep.subr.bf16.mxu0 %v358
    %436 = vmatpush1.bf16.msra.mxu0 %v357
    %437 = vmatprep.subr.bf16.mxu0 %v354
    %438 = vmatpush1.bf16.msra.mxu0 %v353
    %439 = vmatprep.subr.bf16.mxu0 %v350
    %440 = vmatpush1.bf16.msra.mxu0 %v349
    %441 = vmatprep.subr.bf16.mxu0 0
    %442 = vmatpush2.bf16.msra.mxu0 0
    %443 = vmatprep.subr.bf16.mxu0 0
    %444 = vmatpush2.bf16.msra.mxu0 0
    %445 = vmatprep.subr.bf16.mxu0 0
    %446 = vmatpush2.bf16.msra.mxu0 0
    %447 = vmatprep.subr.bf16.mxu0 0
    %448 = vmatpush2.bf16.msra.mxu0 0
    %449 = vmatprep.subr.bf16.mxu0 0
    %450 = vmatpush2.bf16.msra.mxu0 0
    %451 = vmatprep.subr.bf16.mxu0 0
    %452 = vmatpush2.bf16.msra.mxu0 0
    %453 = vmatprep.subr.bf16.mxu0 0
    %454 = vmatpush2.bf16.msra.mxu0 0
    %455 = vmatprep.subr.bf16.mxu0 0
    %456 = vmatpush2.bf16.msra.mxu0 0
    %457 = vmatprep.mubr.bf16.mxu0 0
    %458 = vmatmul.mubr.bf16.gmra.mxu0 %v369
    %v459 = vpop.f32.mrf.mxu0
    %v460 = vadd.f32 0.0, %v459
    %v461 = vpop.f32.mrf.mxu0
    %v462 = vadd.f32 0.0, %v461
    %v463 = vpop.f32.mrf.mxu0
    %v464 = vpop.f32.mrf.mxu0
    %465 = vdwg.mxu0
    %s466 = smul.u32 0, 512
    %s467 = sshra.s32 %s466, 7
    %s468 = sand.u32 %s466, 127
    %s469 = smul.addr %s467, 8
    %s470 = scalar_lea.vmem [#allocation9], %s469
    %471 = vst [vmem:[%s470] sm:$0xff] %v419
    %472 = vst [vmem:[%s470 + $0x8] sm:$0xff] %v421
    %473 = vst [vmem:[%s470 + $0x10] sm:$0xff] %v460
    %474 = vst [vmem:[%s470 + $0x18] sm:$0xff] %v462
    %p475 = scmp.eq.s32.totalorder 0, 0
    // Predicated region
    $region30: #{tpu_custom_call.1} parent=1 // pred_check
      %p476 = pneg %p475
    $region31: #{tpu_custom_call.1} parent=1 // pred_check_branch
      %478 = sbr.rel (%p476) target = $region33
    $region32: #{tpu_custom_call.1} parent=1 // pred_region
      %vm479 = vcmask 7168
      %480 = vst.msk [vmem:[#allocation2] sm:$0xff] %vm479, 0.0
      %481 = vst.msk [vmem:[#allocation3] sm:$0xff] %vm479, 0.0
    $region33: #{tpu_custom_call.1} parent=1 // pred_fallthru
      _
    %v482 = vld [vmem:[#allocation2] sm:$0xff]
    %v483 = vadd.f32 %v419, %v421
    %v484 = vadd.f32 %v483, %v460
    %v485 = vadd.f32 %v484, %v462
    %486 = vadd.xlane.f32.xlu0 %v485
    %v487 = vpop.xlane.xlu0 %486
    %v488 = vadd.f32 %v482, %v487
    %vm489 = vcmask 7168
    %490 = vst.msk [vmem:[#allocation2] sm:$0xff] %vm489, %v488
    %v491 = vld [vmem:[#allocation3] sm:$0xff]
    %v492 = vmul.f32 %v419, %v419
    %v493 = vmul.f32 %v421, %v421
    %v494 = vmul.f32 %v460, %v460
    %v495 = vmul.f32 %v462, %v462
    %v496 = vadd.f32 %v492, %v493
    %v497 = vadd.f32 %v496, %v494
    %v498 = vadd.f32 %v497, %v495
    %499 = vadd.xlane.f32.xlu0 %v498
    %v500 = vpop.xlane.xlu0 %499
    %v501 = vadd.f32 %v491, %v500
    %502 = vst.msk [vmem:[#allocation3] sm:$0xff] %vm489, %v501
    // Predicated region
    $region34: #{tpu_custom_call.1} parent=1 // pred_check
      %p503 = pneg %p475
    $region35: #{tpu_custom_call.1} parent=1 // pred_check_branch
      %505 = sbr.rel (%p503) target = $region37
    $region36: #{tpu_custom_call.1} parent=1 // pred_region
      %v506 = vld [vmem:[#allocation2] sm:$0xff]
      %v507 = vrcp.pop 512.0
      %v508 = vmul.f32 %v506, %v507
      %v509 = vld [vmem:[#allocation3] sm:$0xff]
      %v510 = vmul.f32 %v509, %v507
      %v511 = vmul.f32 %v508, %v508
      %v512 = vsub.f32 %v510, %v511
      %v513 = vmax.f32 %v512, 0.0
      %v514 = vld [vmem:[%s3] sm:$0xff]
      %v515 = vadd.f32 %v513, 1e-05
      %v516 = vrsqrt.pop %v515
      %v517 = vmul.f32 %v514, %v516
      %v518 = vld [vmem:[%s4] sm:$0xff]
      %v519 = vmul.f32 %v508, %v517
      %v520 = vsub.f32 %v518, %v519
      %v521 = vld [vmem:[#allocation9] sm:$0xff]
      %v522 = vld [vmem:[#allocation9 + $0x8] sm:$0xff]
      %v523 = vld [vmem:[#allocation9 + $0x10] sm:$0xff]
      %v524 = vld [vmem:[#allocation9 + $0x18] sm:$0xff]
      %526 = vset.pattern.permute.xlu0 0
      %527 = vperm.xlu0 %526, %v517
      %v528 = vpop.permute.xlu0 %527
      %v530 = vmul.f32 %v521, %v528
      %v531 = vmul.f32 %v522, %v528
      %v532 = vmul.f32 %v523, %v528
      %v533 = vmul.f32 %v524, %v528
      %535 = vset.pattern.permute.xlu0 0
      %536 = vperm.xlu0 %535, %v520
      %v537 = vpop.permute.xlu0 %536
      %v539 = vadd.f32 %v530, %v537
      %v540 = vadd.f32 %v531, %v537
      %v541 = vadd.f32 %v532, %v537
      %v542 = vadd.f32 %v533, %v537
      %v543 = vmax.f32 %v539, 0.0
      %v544 = vmax.f32 %v540, 0.0
      %v545 = vmax.f32 %v541, 0.0
      %v546 = vmax.f32 %v542, 0.0
      %547 = vst [vmem:[#allocation9] sm:$0xff] %v543
      %548 = vst [vmem:[#allocation9 + $0x8] sm:$0xff] %v544
      %549 = vst [vmem:[#allocation9 + $0x10] sm:$0xff] %v545
      %550 = vst [vmem:[#allocation9 + $0x18] sm:$0xff] %v546
    $region37: #{tpu_custom_call.1} parent=1 // pred_fallthru
      _
    // Predicated region
    $region38: #{tpu_custom_call.1} parent=1 // pred_check
      _
    $region39: #{tpu_custom_call.1} parent=1 // pred_check_branch
      %552 = sbr.rel (0) target = $region41
    $region40: #{tpu_custom_call.1} parent=1 // pred_region
      %s554 = ssub.s32 512, 512
      %555 = vsyncadd [#allocation6], %s554
      %s557 = sshll.u32 [#allocation9], 4
      %s558 = int_to_ptr.vmem [resolvable:$true] %s557
      %560 = dma.vmem_to_hbm [thread:$0]  %s558, 512, %s5, [#allocation6]
    $region41: #{tpu_custom_call.1} parent=1 // pred_fallthru
      _
    // Predicated region
    $region42: #{tpu_custom_call.1} parent=1 // pred_check
      _
    $region43: #{tpu_custom_call.1} parent=1 // pred_check_branch
      %562 = sbr.rel (0) target = $region45
    $region44: #{tpu_custom_call.1} parent=1 // pred_region
      %563 = dma.done [#allocation6], 512
    $region45: #{tpu_custom_call.1} parent=1 // pred_fallthru
      _
    %564 = vsyncpa [#allocation5], 1
    %565 = vsyncpa [#allocation8], 1
    %566 = vsyncpa [#allocation6], 1

</llo_original>
